<compile_context>
chip_gen: v6e
topology: v6e:2x2x1
jax: 0.10.0
libtpu: 0.0.40
codegen_flags: <defaults>
</compile_context>

<pallas_src>
import jax
import jax.numpy as jnp
from jax.experimental import pallas as pl
from jax.experimental.pallas import tpu as pltpu


def _round_up(x, m):
    return (x + m - 1) // m * m


def _character_lid_kernel(idx_ref, table_ref, w_ref, b_ref, out_ref):
    # idx_ref:   (Bp, L)   int32   bag indices (one bag per row)
    # table_ref: (Vp, Dp)  float32 zero-padded embedding table
    # w_ref:     (Dp, Cp)  float32 linear weight, pre-transposed to (in, out)
    # b_ref:     (1, Cp)   float32 zero-padded linear bias row
    # out_ref:   (Bp, Cp)  float32 logits (padded; wrapper slices)
    idx = idx_ref[...]                                   # (Bp, L)
    Bp, L = idx.shape
    Vp = table_ref.shape[0]

    # ---- fused EmbeddingBag gather + mean-pool ----
    # Build the per-bag vocab-count matrix (Bp, Vp) directly.  L is a small
    # static constant, so this fully unrolls into cheap 2-D compare/add ops on
    # a single lane-dense (8,128) tile — no (B*L, V) one-hot, no pooling matmul.
    vocab = jax.lax.broadcasted_iota(jnp.int32, (Bp, Vp), 1)
    counts = jnp.zeros((Bp, Vp), jnp.float32)
    for l in range(L):
        counts = counts + (vocab == idx[:, l:l + 1]).astype(jnp.float32)
    bag = counts * jnp.float32(1.0 / L)                  # mean-pool weights

    # Single (Bp,Vp)@(Vp,Dp) MXU matmul == mean of gathered embeddings.
    pooled = jnp.dot(bag, table_ref[...],
                     preferred_element_type=jnp.float32)  # (Bp, Dp)

    # ---- Linear: weight already (Dp, Cp); no in-kernel transpose ----
    logits = jnp.dot(pooled, w_ref[...],
                     preferred_element_type=jnp.float32)  # (Bp, Cp)
    out_ref[...] = (logits + b_ref[...]).astype(out_ref.dtype)


def character_lid_forward(indices, emb_table, lin_w, lin_b):
    """indices: (B, L) int; emb_table: (V, D); lin_w: (C, D); lin_b: (C,)."""
    B, L = indices.shape
    V, D = emb_table.shape
    C = lin_w.shape[0]

    # Lane/sublane-dense padded shapes.
    Bp = _round_up(B, 8)
    Vp = _round_up(V, 128)
    Dp = _round_up(D, 128)
    Cp = _round_up(C, 128)

    idx_p = jnp.zeros((Bp, L), jnp.int32).at[:B].set(indices.astype(jnp.int32))
    table_p = jnp.zeros((Vp, Dp), jnp.float32).at[:V, :D].set(
        emb_table.astype(jnp.float32))
    w_p = jnp.zeros((Dp, Cp), jnp.float32).at[:D, :C].set(
        lin_w.astype(jnp.float32).T)                     # (in, out) layout
    b_p = jnp.zeros((1, Cp), jnp.float32).at[0, :C].set(
        lin_b.astype(jnp.float32))

    out_p = pl.pallas_call(
        _character_lid_kernel,
        out_shape=jax.ShapeDtypeStruct((Bp, Cp), jnp.float32),
        in_specs=[
            pl.BlockSpec(memory_space=pltpu.MemorySpace.VMEM),  # indices
            pl.BlockSpec(memory_space=pltpu.MemorySpace.VMEM),  # embedding table
            pl.BlockSpec(memory_space=pltpu.MemorySpace.VMEM),  # (D, C) weight
            pl.BlockSpec(memory_space=pltpu.MemorySpace.VMEM),  # bias row
        ],
        out_specs=pl.BlockSpec(memory_space=pltpu.MemorySpace.VMEM),
    )(idx_p, table_p, w_p, b_p)

    return out_p[:B, :C]


if __name__ == "__main__":
    # Module hyper-parameters (small, consistent with CharacterLID defaults)
    num_emb_chars = 50     # character vocabulary
    num_emb_out = 100      # embedding dim (PyTorch default num_emb_out=100)
    num_classes = 21       # PyTorch default
    B, L = 8, 16           # 8 bags of 16 character indices each

    key = jax.random.PRNGKey(0)
    k_idx, k_emb, k_w, k_b = jax.random.split(key, 4)

    emb_table = jax.random.normal(k_emb, (num_emb_chars, num_emb_out), jnp.float32)
    lin_w = jax.random.normal(k_w, (num_classes, num_emb_out), jnp.float32) * 0.1
    lin_b = jax.random.normal(k_b, (num_classes,), jnp.float32) * 0.1
    indices = jax.random.randint(k_idx, (B, L), 0, num_emb_chars, jnp.int32)

    out = character_lid_forward(indices, emb_table, lin_w, lin_b)
    out = jax.block_until_ready(out)

    # Pure-JAX reference: EmbeddingBag(mean) + Linear
    ref = jnp.mean(emb_table[indices], axis=1) @ lin_w.T + lin_b
    assert out.shape == (B, num_classes)
    assert jnp.allclose(out, ref, atol=1e-4, rtol=1e-4), "mismatch vs reference"

    print("KERNEL_OK")
</pallas_src>

<mosaic_0001>
module attributes {stable_mosaic.version = 11 : i64} {
  func.func @_character_lid_kernel(%arg0: memref<8x16xi32, #tpu.memory_space<vmem>>, %arg1: memref<128x128xf32, #tpu.memory_space<vmem>>, %arg2: memref<128x128xf32, #tpu.memory_space<vmem>>, %arg3: memref<1x128xf32, #tpu.memory_space<vmem>>, %arg4: memref<8x128xf32, #tpu.memory_space<vmem>>) attributes {dimension_semantics = [], scalar_prefetch = 0 : i64, scratch_operands = 0 : i64, tpu.core_type = #tpu.core_type<tc>} {
    %c0 = arith.constant 0 : index
    %c0_0 = arith.constant 0 : index
    %0 = vector.load %arg0[%c0, %c0_0] : memref<8x16xi32, #tpu.memory_space<vmem>>, vector<8x16xi32>
    %1 = tpu.iota {dimensions = array<i32: 1>} : vector<8x128xi32>
    %cst = arith.constant 0.000000e+00 : f32
    %2 = vector.broadcast %cst : f32 to vector<8x128xf32>
    %3 = vector.extract_strided_slice %0 {offsets = [0, 0], sizes = [8, 1], strides = [1, 1]} : vector<8x16xi32> to vector<8x1xi32>
    %4 = vector.broadcast %3 : vector<8x1xi32> to vector<8x128xi32>
    %5 = arith.cmpi eq, %1, %4 : vector<8x128xi32>
    %6 = arith.extui %5 : vector<8x128xi1> to vector<8x128xi32>
    %7 = arith.sitofp %6 : vector<8x128xi32> to vector<8x128xf32>
    %8 = arith.addf %2, %7 : vector<8x128xf32>
    %9 = vector.extract_strided_slice %0 {offsets = [0, 1], sizes = [8, 1], strides = [1, 1]} : vector<8x16xi32> to vector<8x1xi32>
    %10 = vector.broadcast %9 : vector<8x1xi32> to vector<8x128xi32>
    %11 = arith.cmpi eq, %1, %10 : vector<8x128xi32>
    %12 = arith.extui %11 : vector<8x128xi1> to vector<8x128xi32>
    %13 = arith.sitofp %12 : vector<8x128xi32> to vector<8x128xf32>
    %14 = arith.addf %8, %13 : vector<8x128xf32>
    %15 = vector.extract_strided_slice %0 {offsets = [0, 2], sizes = [8, 1], strides = [1, 1]} : vector<8x16xi32> to vector<8x1xi32>
    %16 = vector.broadcast %15 : vector<8x1xi32> to vector<8x128xi32>
    %17 = arith.cmpi eq, %1, %16 : vector<8x128xi32>
    %18 = arith.extui %17 : vector<8x128xi1> to vector<8x128xi32>
    %19 = arith.sitofp %18 : vector<8x128xi32> to vector<8x128xf32>
    %20 = arith.addf %14, %19 : vector<8x128xf32>
    %21 = vector.extract_strided_slice %0 {offsets = [0, 3], sizes = [8, 1], strides = [1, 1]} : vector<8x16xi32> to vector<8x1xi32>
    %22 = vector.broadcast %21 : vector<8x1xi32> to vector<8x128xi32>
    %23 = arith.cmpi eq, %1, %22 : vector<8x128xi32>
    %24 = arith.extui %23 : vector<8x128xi1> to vector<8x128xi32>
    %25 = arith.sitofp %24 : vector<8x128xi32> to vector<8x128xf32>
    %26 = arith.addf %20, %25 : vector<8x128xf32>
    %27 = vector.extract_strided_slice %0 {offsets = [0, 4], sizes = [8, 1], strides = [1, 1]} : vector<8x16xi32> to vector<8x1xi32>
    %28 = vector.broadcast %27 : vector<8x1xi32> to vector<8x128xi32>
    %29 = arith.cmpi eq, %1, %28 : vector<8x128xi32>
    %30 = arith.extui %29 : vector<8x128xi1> to vector<8x128xi32>
    %31 = arith.sitofp %30 : vector<8x128xi32> to vector<8x128xf32>
    %32 = arith.addf %26, %31 : vector<8x128xf32>
    %33 = vector.extract_strided_slice %0 {offsets = [0, 5], sizes = [8, 1], strides = [1, 1]} : vector<8x16xi32> to vector<8x1xi32>
    %34 = vector.broadcast %33 : vector<8x1xi32> to vector<8x128xi32>
    %35 = arith.cmpi eq, %1, %34 : vector<8x128xi32>
    %36 = arith.extui %35 : vector<8x128xi1> to vector<8x128xi32>
    %37 = arith.sitofp %36 : vector<8x128xi32> to vector<8x128xf32>
    %38 = arith.addf %32, %37 : vector<8x128xf32>
    %39 = vector.extract_strided_slice %0 {offsets = [0, 6], sizes = [8, 1], strides = [1, 1]} : vector<8x16xi32> to vector<8x1xi32>
    %40 = vector.broadcast %39 : vector<8x1xi32> to vector<8x128xi32>
    %41 = arith.cmpi eq, %1, %40 : vector<8x128xi32>
    %42 = arith.extui %41 : vector<8x128xi1> to vector<8x128xi32>
    %43 = arith.sitofp %42 : vector<8x128xi32> to vector<8x128xf32>
    %44 = arith.addf %38, %43 : vector<8x128xf32>
    %45 = vector.extract_strided_slice %0 {offsets = [0, 7], sizes = [8, 1], strides = [1, 1]} : vector<8x16xi32> to vector<8x1xi32>
    %46 = vector.broadcast %45 : vector<8x1xi32> to vector<8x128xi32>
    %47 = arith.cmpi eq, %1, %46 : vector<8x128xi32>
    %48 = arith.extui %47 : vector<8x128xi1> to vector<8x128xi32>
    %49 = arith.sitofp %48 : vector<8x128xi32> to vector<8x128xf32>
    %50 = arith.addf %44, %49 : vector<8x128xf32>
    %51 = vector.extract_strided_slice %0 {offsets = [0, 8], sizes = [8, 1], strides = [1, 1]} : vector<8x16xi32> to vector<8x1xi32>
    %52 = vector.broadcast %51 : vector<8x1xi32> to vector<8x128xi32>
    %53 = arith.cmpi eq, %1, %52 : vector<8x128xi32>
    %54 = arith.extui %53 : vector<8x128xi1> to vector<8x128xi32>
    %55 = arith.sitofp %54 : vector<8x128xi32> to vector<8x128xf32>
    %56 = arith.addf %50, %55 : vector<8x128xf32>
    %57 = vector.extract_strided_slice %0 {offsets = [0, 9], sizes = [8, 1], strides = [1, 1]} : vector<8x16xi32> to vector<8x1xi32>
    %58 = vector.broadcast %57 : vector<8x1xi32> to vector<8x128xi32>
    %59 = arith.cmpi eq, %1, %58 : vector<8x128xi32>
    %60 = arith.extui %59 : vector<8x128xi1> to vector<8x128xi32>
    %61 = arith.sitofp %60 : vector<8x128xi32> to vector<8x128xf32>
    %62 = arith.addf %56, %61 : vector<8x128xf32>
    %63 = vector.extract_strided_slice %0 {offsets = [0, 10], sizes = [8, 1], strides = [1, 1]} : vector<8x16xi32> to vector<8x1xi32>
    %64 = vector.broadcast %63 : vector<8x1xi32> to vector<8x128xi32>
    %65 = arith.cmpi eq, %1, %64 : vector<8x128xi32>
    %66 = arith.extui %65 : vector<8x128xi1> to vector<8x128xi32>
    %67 = arith.sitofp %66 : vector<8x128xi32> to vector<8x128xf32>
    %68 = arith.addf %62, %67 : vector<8x128xf32>
    %69 = vector.extract_strided_slice %0 {offsets = [0, 11], sizes = [8, 1], strides = [1, 1]} : vector<8x16xi32> to vector<8x1xi32>
    %70 = vector.broadcast %69 : vector<8x1xi32> to vector<8x128xi32>
    %71 = arith.cmpi eq, %1, %70 : vector<8x128xi32>
    %72 = arith.extui %71 : vector<8x128xi1> to vector<8x128xi32>
    %73 = arith.sitofp %72 : vector<8x128xi32> to vector<8x128xf32>
    %74 = arith.addf %68, %73 : vector<8x128xf32>
    %75 = vector.extract_strided_slice %0 {offsets = [0, 12], sizes = [8, 1], strides = [1, 1]} : vector<8x16xi32> to vector<8x1xi32>
    %76 = vector.broadcast %75 : vector<8x1xi32> to vector<8x128xi32>
    %77 = arith.cmpi eq, %1, %76 : vector<8x128xi32>
    %78 = arith.extui %77 : vector<8x128xi1> to vector<8x128xi32>
    %79 = arith.sitofp %78 : vector<8x128xi32> to vector<8x128xf32>
    %80 = arith.addf %74, %79 : vector<8x128xf32>
    %81 = vector.extract_strided_slice %0 {offsets = [0, 13], sizes = [8, 1], strides = [1, 1]} : vector<8x16xi32> to vector<8x1xi32>
    %82 = vector.broadcast %81 : vector<8x1xi32> to vector<8x128xi32>
    %83 = arith.cmpi eq, %1, %82 : vector<8x128xi32>
    %84 = arith.extui %83 : vector<8x128xi1> to vector<8x128xi32>
    %85 = arith.sitofp %84 : vector<8x128xi32> to vector<8x128xf32>
    %86 = arith.addf %80, %85 : vector<8x128xf32>
    %87 = vector.extract_strided_slice %0 {offsets = [0, 14], sizes = [8, 1], strides = [1, 1]} : vector<8x16xi32> to vector<8x1xi32>
    %88 = vector.broadcast %87 : vector<8x1xi32> to vector<8x128xi32>
    %89 = arith.cmpi eq, %1, %88 : vector<8x128xi32>
    %90 = arith.extui %89 : vector<8x128xi1> to vector<8x128xi32>
    %91 = arith.sitofp %90 : vector<8x128xi32> to vector<8x128xf32>
    %92 = arith.addf %86, %91 : vector<8x128xf32>
    %93 = vector.extract_strided_slice %0 {offsets = [0, 15], sizes = [8, 1], strides = [1, 1]} : vector<8x16xi32> to vector<8x1xi32>
    %94 = vector.broadcast %93 : vector<8x1xi32> to vector<8x128xi32>
    %95 = arith.cmpi eq, %1, %94 : vector<8x128xi32>
    %96 = arith.extui %95 : vector<8x128xi1> to vector<8x128xi32>
    %97 = arith.sitofp %96 : vector<8x128xi32> to vector<8x128xf32>
    %98 = arith.addf %92, %97 : vector<8x128xf32>
    %cst_1 = arith.constant 6.250000e-02 : f32
    %99 = vector.broadcast %cst_1 : f32 to vector<8x128xf32>
    %100 = arith.mulf %98, %99 : vector<8x128xf32>
    %c0_2 = arith.constant 0 : index
    %c0_3 = arith.constant 0 : index
    %101 = vector.load %arg1[%c0_2, %c0_3] : memref<128x128xf32, #tpu.memory_space<vmem>>, vector<128x128xf32>
    %cst_4 = arith.constant dense<0.000000e+00> : vector<8x128xf32>
    %102 = tpu.matmul %100, %101, %cst_4 {dimension_numbers = #tpu.dot_dimension_numbers<[1], [0], [0], [1], [0, 0, 1, 1], [], []>} : vector<8x128xf32>, vector<128x128xf32>, vector<8x128xf32> -> vector<8x128xf32>
    %c0_5 = arith.constant 0 : index
    %c0_6 = arith.constant 0 : index
    %103 = vector.load %arg2[%c0_5, %c0_6] : memref<128x128xf32, #tpu.memory_space<vmem>>, vector<128x128xf32>
    %cst_7 = arith.constant dense<0.000000e+00> : vector<8x128xf32>
    %104 = tpu.matmul %102, %103, %cst_7 {dimension_numbers = #tpu.dot_dimension_numbers<[1], [0], [0], [1], [0, 0, 1, 1], [], []>} : vector<8x128xf32>, vector<128x128xf32>, vector<8x128xf32> -> vector<8x128xf32>
    %c0_8 = arith.constant 0 : index
    %c0_9 = arith.constant 0 : index
    %105 = vector.load %arg3[%c0_8, %c0_9] : memref<1x128xf32, #tpu.memory_space<vmem>>, vector<1x128xf32>
    %106 = vector.broadcast %105 : vector<1x128xf32> to vector<8x128xf32>
    %107 = arith.addf %104, %106 : vector<8x128xf32>
    %c0_10 = arith.constant 0 : index
    %c0_11 = arith.constant 0 : index
    %108 = vector.load %arg4[%c0_10, %c0_11] : memref<8x128xf32, #tpu.memory_space<vmem>>, vector<8x128xf32>
    tpu.vector_store %arg4[%c0_10, %c0_11], %107 {strides = array<i32>} : memref<8x128xf32, #tpu.memory_space<vmem>>, vector<8x128xf32>,
    return
  }
}

</mosaic_0001>

<llo_original>
// kernel: tpu_custom_call.1
$region0: #{tpu_custom_call.1}
  #allocation0 [shape = 'u32[]', space=smem, size = 0x4, offset = 0x4, fixed_abs, tag = 'smem constant byte address 0x4 - core index']
  #allocation1 [shape = 'u32[144,128]{1,0:T(1,128)}', space=vmem, size = 0x12000, scoped, tag = 'internal scratch']
  %s0 = inlined_call_operand.hbm [shape: s32[8,16], index: 0, kind: input, shape index: {}]
  %s1 = inlined_call_operand.hbm [shape: f32[128,128], index: 1, kind: input, shape index: {}]
  %s2 = inlined_call_operand.hbm [shape: f32[128,128], index: 2, kind: input, shape index: {}]
  %s3 = inlined_call_operand.vmem [shape: f32[1,128], index: 3, kind: input, shape index: {}]
  %s4 = inlined_call_operand.hbm [shape: f32[8,128], index: 4, kind: output, shape index: {}]
  %s5 = sld [smem:[#allocation0]]
  $region38: #{tpu_custom_call.1} parent=0
    _
  %s7 = ssub.s32 1, %s5
  %s8 = scalar_select 0, %s7, %s5
  $region1: #{tpu_custom_call.1} parent=0
    #allocation2 [shape = 'u8[4096]{0}', space=vmem, size = 0x1000, scoped, tag = 'input window, operand 0, single buffered']
    #allocation3 [shape = 's32[1]{0}', space=sflag, size = 0x4, scoped, tag = 'scoped memory for tpu_custom_call.1']
    #allocation4 [shape = 's32[1]{0}', space=sflag, size = 0x4, scoped, tag = 'scoped memory for tpu_custom_call.1']
    #allocation5 [shape = 'u8[65536]{0}', space=vmem, size = 0x10000, scoped, tag = 'input window, operand 1, single buffered']
    #allocation6 [shape = 's32[1]{0}', space=sflag, size = 0x4, scoped, tag = 'scoped memory for tpu_custom_call.1']
    #allocation7 [shape = 'u8[65536]{0}', space=vmem, size = 0x10000, scoped, tag = 'input window, operand 2, single buffered']
    #allocation8 [shape = 'u8[4096]{0}', space=vmem, size = 0x1000, scoped, tag = 'output window, operand 0, single buffered']
    %9 = vsyncpa [#allocation3], 0
    %10 = vsyncpa [#allocation6], 0
    %11 = vsyncpa [#allocation4], 0
    // Predicated region
    $region2: #{tpu_custom_call.1} parent=1 // pred_check
      _
    $region3: #{tpu_custom_call.1} parent=1 // pred_check_branch
      %13 = sbr.rel (0) target = $region5
    $region4: #{tpu_custom_call.1} parent=1 // pred_region
      %s15 = ssub.s32 128, 128
      %16 = vsyncadd [#allocation3], %s15
      %s18 = sshll.u32 [#allocation2], 4
      %s19 = int_to_ptr.vmem [resolvable:$true] %s18
      %21 = dma.hbm_to_vmem [thread:$0]  %s0, 128, %s19, [#allocation3]
    $region5: #{tpu_custom_call.1} parent=1 // pred_fallthru
      _
    // Predicated region
    $region6: #{tpu_custom_call.1} parent=1 // pred_check
      _
    $region7: #{tpu_custom_call.1} parent=1 // pred_check_branch
      %23 = sbr.rel (0) target = $region9
    $region8: #{tpu_custom_call.1} parent=1 // pred_region
      %s25 = ssub.s32 2048, 2048
      %26 = vsyncadd [#allocation6], %s25
      %s27 = sshll.u32 [#allocation5], 4
      %s28 = int_to_ptr.vmem [resolvable:$true] %s27
      %33 = dma.hbm_to_vmem [thread:$0]  %s1, 2048, %s28, [#allocation6], 128, 128, 8
    $region9: #{tpu_custom_call.1} parent=1 // pred_fallthru
      _
    // Predicated region
    $region10: #{tpu_custom_call.1} parent=1 // pred_check
      _
    $region11: #{tpu_custom_call.1} parent=1 // pred_check_branch
      %35 = sbr.rel (0) target = $region13
    $region12: #{tpu_custom_call.1} parent=1 // pred_region
      %s37 = ssub.s32 2048, 2048
      %38 = vsyncadd [#allocation6], %s37
      %s39 = sshll.u32 [#allocation7], 4
      %s40 = int_to_ptr.vmem [resolvable:$true] %s39
      %45 = dma.hbm_to_vmem [thread:$0]  %s2, 2048, %s40, [#allocation6], 128, 128, 8
    $region13: #{tpu_custom_call.1} parent=1 // pred_fallthru
      _
    // Predicated region
    $region14: #{tpu_custom_call.1} parent=1 // pred_check
      _
    $region15: #{tpu_custom_call.1} parent=1 // pred_check_branch
      %47 = sbr.rel (0) target = $region17
    $region16: #{tpu_custom_call.1} parent=1 // pred_region
      _
    $region17: #{tpu_custom_call.1} parent=1 // pred_fallthru
      _
    // Predicated region
    $region18: #{tpu_custom_call.1} parent=1 // pred_check
      _
    $region19: #{tpu_custom_call.1} parent=1 // pred_check_branch
      %49 = sbr.rel (0) target = $region21
    $region20: #{tpu_custom_call.1} parent=1 // pred_region
      %50 = dma.done [#allocation3], 128
    $region21: #{tpu_custom_call.1} parent=1 // pred_fallthru
      _
    // Predicated region
    $region22: #{tpu_custom_call.1} parent=1 // pred_check
      _
    $region23: #{tpu_custom_call.1} parent=1 // pred_check_branch
      %52 = sbr.rel (0) target = $region25
    $region24: #{tpu_custom_call.1} parent=1 // pred_region
      %53 = dma.done [#allocation6], 2048
    $region25: #{tpu_custom_call.1} parent=1 // pred_fallthru
      _
    // Predicated region
    $region26: #{tpu_custom_call.1} parent=1 // pred_check
      _
    $region27: #{tpu_custom_call.1} parent=1 // pred_check_branch
      %55 = sbr.rel (0) target = $region29
    $region28: #{tpu_custom_call.1} parent=1 // pred_region
      %56 = dma.done [#allocation6], 2048
    $region29: #{tpu_custom_call.1} parent=1 // pred_fallthru
      _
    %v57 = vld [vmem:[#allocation2] sm:$0xff]
    %v58 = vlaneseq
    %v59 = vand.u32 %v58, 127
    %60 = vset.pattern.permute.xlu0 0
    %61 = vperm.xlu0 %60, %v57
    %v62 = vpop.permute.xlu0 %61
    %vm63 = vcmp.eq.s32.totalorder %v59, %v62
    %v64 = vsel %vm63, 1, 0
    %v65 = vcvt.s32.f32 %v64
    %v66 = vadd.f32 %v65, 0.0
    %67 = vset.pattern.permute.xlu0 1
    %68 = vperm.xlu0 %67, %v57
    %v69 = vpop.permute.xlu0 %68
    %vm70 = vcmp.eq.s32.totalorder %v59, %v69
    %v71 = vsel %vm70, 1, 0
    %v72 = vcvt.s32.f32 %v71
    %v73 = vadd.f32 %v66, %v72
    %74 = vset.pattern.permute.xlu0 2
    %75 = vperm.xlu0 %74, %v57
    %v76 = vpop.permute.xlu0 %75
    %vm77 = vcmp.eq.s32.totalorder %v59, %v76
    %v78 = vsel %vm77, 1, 0
    %v79 = vcvt.s32.f32 %v78
    %v80 = vadd.f32 %v73, %v79
    %81 = vset.pattern.permute.xlu0 3
    %82 = vperm.xlu0 %81, %v57
    %v83 = vpop.permute.xlu0 %82
    %vm84 = vcmp.eq.s32.totalorder %v59, %v83
    %v85 = vsel %vm84, 1, 0
    %v86 = vcvt.s32.f32 %v85
    %v87 = vadd.f32 %v80, %v86
    %88 = vset.pattern.permute.xlu0 4
    %89 = vperm.xlu0 %88, %v57
    %v90 = vpop.permute.xlu0 %89
    %vm91 = vcmp.eq.s32.totalorder %v59, %v90
    %v92 = vsel %vm91, 1, 0
    %v93 = vcvt.s32.f32 %v92
    %v94 = vadd.f32 %v87, %v93
    %95 = vset.pattern.permute.xlu0 5
    %96 = vperm.xlu0 %95, %v57
    %v97 = vpop.permute.xlu0 %96
    %vm98 = vcmp.eq.s32.totalorder %v59, %v97
    %v99 = vsel %vm98, 1, 0
    %v100 = vcvt.s32.f32 %v99
    %v101 = vadd.f32 %v94, %v100
    %102 = vset.pattern.permute.xlu0 6
    %103 = vperm.xlu0 %102, %v57
    %v104 = vpop.permute.xlu0 %103
    %vm105 = vcmp.eq.s32.totalorder %v59, %v104
    %v106 = vsel %vm105, 1, 0
    %v107 = vcvt.s32.f32 %v106
    %v108 = vadd.f32 %v101, %v107
    %109 = vset.pattern.permute.xlu0 7
    %110 = vperm.xlu0 %109, %v57
    %v111 = vpop.permute.xlu0 %110
    %vm112 = vcmp.eq.s32.totalorder %v59, %v111
    %v113 = vsel %vm112, 1, 0
    %v114 = vcvt.s32.f32 %v113
    %v115 = vadd.f32 %v108, %v114
    %116 = vset.pattern.permute.xlu0 8
    %117 = vperm.xlu0 %116, %v57
    %v118 = vpop.permute.xlu0 %117
    %vm119 = vcmp.eq.s32.totalorder %v59, %v118
    %v120 = vsel %vm119, 1, 0
    %v121 = vcvt.s32.f32 %v120
    %v122 = vadd.f32 %v115, %v121
    %123 = vset.pattern.permute.xlu0 9
    %124 = vperm.xlu0 %123, %v57
    %v125 = vpop.permute.xlu0 %124
    %vm126 = vcmp.eq.s32.totalorder %v59, %v125
    %v127 = vsel %vm126, 1, 0
    %v128 = vcvt.s32.f32 %v127
    %v129 = vadd.f32 %v122, %v128
    %130 = vset.pattern.permute.xlu0 10
    %131 = vperm.xlu0 %130, %v57
    %v132 = vpop.permute.xlu0 %131
    %vm133 = vcmp.eq.s32.totalorder %v59, %v132
    %v134 = vsel %vm133, 1, 0
    %v135 = vcvt.s32.f32 %v134
    %v136 = vadd.f32 %v129, %v135
    %137 = vset.pattern.permute.xlu0 11
    %138 = vperm.xlu0 %137, %v57
    %v139 = vpop.permute.xlu0 %138
    %vm140 = vcmp.eq.s32.totalorder %v59, %v139
    %v141 = vsel %vm140, 1, 0
    %v142 = vcvt.s32.f32 %v141
    %v143 = vadd.f32 %v136, %v142
    %144 = vset.pattern.permute.xlu0 12
    %145 = vperm.xlu0 %144, %v57
    %v146 = vpop.permute.xlu0 %145
    %vm147 = vcmp.eq.s32.totalorder %v59, %v146
    %v148 = vsel %vm147, 1, 0
    %v149 = vcvt.s32.f32 %v148
    %v150 = vadd.f32 %v143, %v149
    %151 = vset.pattern.permute.xlu0 13
    %152 = vperm.xlu0 %151, %v57
    %v153 = vpop.permute.xlu0 %152
    %vm154 = vcmp.eq.s32.totalorder %v59, %v153
    %v155 = vsel %vm154, 1, 0
    %v156 = vcvt.s32.f32 %v155
    %v157 = vadd.f32 %v150, %v156
    %158 = vset.pattern.permute.xlu0 14
    %159 = vperm.xlu0 %158, %v57
    %v160 = vpop.permute.xlu0 %159
    %vm161 = vcmp.eq.s32.totalorder %v59, %v160
    %v162 = vsel %vm161, 1, 0
    %v163 = vcvt.s32.f32 %v162
    %v164 = vadd.f32 %v157, %v163
    %165 = vset.pattern.permute.xlu0 15
    %166 = vperm.xlu0 %165, %v57
    %v167 = vpop.permute.xlu0 %166
    %vm168 = vcmp.eq.s32.totalorder %v59, %v167
    %v169 = vsel %vm168, 1, 0
    %v170 = vcvt.s32.f32 %v169
    %v171 = vadd.f32 %v164, %v170
    %v172 = vmul.f32 %v171, 0.0625
    %v173 = vld [vmem:[#allocation5] sm:$0xff]
    %v174 = vld [vmem:[#allocation5 + $0x8] sm:$0xff]
    %v175 = vld [vmem:[#allocation5 + $0x10] sm:$0xff]
    %v176 = vld [vmem:[#allocation5 + $0x18] sm:$0xff]
    %v177 = vld [vmem:[#allocation5 + $0x20] sm:$0xff]
    %v178 = vld [vmem:[#allocation5 + $0x28] sm:$0xff]
    %v179 = vld [vmem:[#allocation5 + $0x30] sm:$0xff]
    %v180 = vld [vmem:[#allocation5 + $0x38] sm:$0xff]
    %v181 = vld [vmem:[#allocation5 + $0x40] sm:$0xff]
    %v182 = vld [vmem:[#allocation5 + $0x48] sm:$0xff]
    %v183 = vld [vmem:[#allocation5 + $0x50] sm:$0xff]
    %v184 = vld [vmem:[#allocation5 + $0x58] sm:$0xff]
    %v185 = vld [vmem:[#allocation5 + $0x60] sm:$0xff]
    %v186 = vld [vmem:[#allocation5 + $0x68] sm:$0xff]
    %v187 = vld [vmem:[#allocation5 + $0x70] sm:$0xff]
    %v188 = vld [vmem:[#allocation5 + $0x78] sm:$0xff]
    %189 = vmatprep.subr.mxu0 0.0
    %190 = vmatpush1.msra.mxu0 %v188
    %191 = vmatprep.subr.mxu0 0.0
    %192 = vmatpush1.msra.mxu0 %v187
    %193 = vmatprep.subr.mxu0 0.0
    %194 = vmatpush1.msra.mxu0 %v186
    %195 = vmatprep.subr.mxu0 0.0
    %196 = vmatpush1.msra.mxu0 %v185
    %197 = vmatprep.subr.mxu0 0.0
    %198 = vmatpush1.msra.mxu0 %v184
    %199 = vmatprep.subr.mxu0 0.0
    %200 = vmatpush1.msra.mxu0 %v183
    %201 = vmatprep.subr.mxu0 0.0
    %202 = vmatpush1.msra.mxu0 %v182
    %203 = vmatprep.subr.mxu0 0.0
    %204 = vmatpush1.msra.mxu0 %v181
    %205 = vmatprep.subr.mxu0 0.0
    %206 = vmatpush1.msra.mxu0 %v180
    %207 = vmatprep.subr.mxu0 0.0
    %208 = vmatpush1.msra.mxu0 %v179
    %209 = vmatprep.subr.mxu0 0.0
    %210 = vmatpush1.msra.mxu0 %v178
    %211 = vmatprep.subr.mxu0 0.0
    %212 = vmatpush1.msra.mxu0 %v177
    %213 = vmatprep.subr.mxu0 0.0
    %214 = vmatpush1.msra.mxu0 %v176
    %215 = vmatprep.subr.mxu0 0.0
    %216 = vmatpush1.msra.mxu0 %v175
    %217 = vmatprep.subr.mxu0 0.0
    %218 = vmatpush1.msra.mxu0 %v174
    %219 = vmatprep.subr.mxu0 0.0
    %220 = vmatpush1.msra.mxu0 %v173
    %221 = vmatprep.subr.mxu0 0.0
    %222 = vmatpush2.msra.mxu0 0.0
    %223 = vmatprep.subr.mxu0 0.0
    %224 = vmatpush2.msra.mxu0 0.0
    %225 = vmatprep.subr.mxu0 0.0
    %226 = vmatpush2.msra.mxu0 0.0
    %227 = vmatprep.subr.mxu0 0.0
    %228 = vmatpush2.msra.mxu0 0.0
    %229 = vmatprep.subr.mxu0 0.0
    %230 = vmatpush2.msra.mxu0 0.0
    %231 = vmatprep.subr.mxu0 0.0
    %232 = vmatpush2.msra.mxu0 0.0
    %233 = vmatprep.subr.mxu0 0.0
    %234 = vmatpush2.msra.mxu0 0.0
    %235 = vmatprep.subr.mxu0 0.0
    %236 = vmatpush2.msra.mxu0 0.0
    %237 = vmatprep.subr.mxu0 0.0
    %238 = vmatpush2.msra.mxu0 0.0
    %239 = vmatprep.subr.mxu0 0.0
    %240 = vmatpush2.msra.mxu0 0.0
    %241 = vmatprep.subr.mxu0 0.0
    %242 = vmatpush2.msra.mxu0 0.0
    %243 = vmatprep.subr.mxu0 0.0
    %244 = vmatpush2.msra.mxu0 0.0
    %245 = vmatprep.subr.mxu0 0.0
    %246 = vmatpush2.msra.mxu0 0.0
    %247 = vmatprep.subr.mxu0 0.0
    %248 = vmatpush2.msra.mxu0 0.0
    %249 = vmatprep.subr.mxu0 0.0
    %250 = vmatpush2.msra.mxu0 0.0
    %251 = vmatprep.subr.mxu0 0.0
    %252 = vmatpush2.msra.mxu0 0.0
    %253 = vmatprep.mubr.f32.mxu0 0.0
    %254 = vmatmul.mubr.f32.gmra.mxu0 %v172
    %v255 = vpop.f32.mrf.mxu0
    %v256 = vadd.f32 0.0, %v255
    %v257 = vpop.f32.mrf.mxu0
    %258 = vdwg.mxu0
    %v259 = vld [vmem:[#allocation7] sm:$0xff]
    %v260 = vld [vmem:[#allocation7 + $0x8] sm:$0xff]
    %v261 = vld [vmem:[#allocation7 + $0x10] sm:$0xff]
    %v262 = vld [vmem:[#allocation7 + $0x18] sm:$0xff]
    %v263 = vld [vmem:[#allocation7 + $0x20] sm:$0xff]
    %v264 = vld [vmem:[#allocation7 + $0x28] sm:$0xff]
    %v265 = vld [vmem:[#allocation7 + $0x30] sm:$0xff]
    %v266 = vld [vmem:[#allocation7 + $0x38] sm:$0xff]
    %v267 = vld [vmem:[#allocation7 + $0x40] sm:$0xff]
    %v268 = vld [vmem:[#allocation7 + $0x48] sm:$0xff]
    %v269 = vld [vmem:[#allocation7 + $0x50] sm:$0xff]
    %v270 = vld [vmem:[#allocation7 + $0x58] sm:$0xff]
    %v271 = vld [vmem:[#allocation7 + $0x60] sm:$0xff]
    %v272 = vld [vmem:[#allocation7 + $0x68] sm:$0xff]
    %v273 = vld [vmem:[#allocation7 + $0x70] sm:$0xff]
    %v274 = vld [vmem:[#allocation7 + $0x78] sm:$0xff]
    %v275 = vld [vmem:[%s3] sm:$0x1]
    %v277 = vlaneseq
    %v278 = vshrl.u32 %v277, 7
    %v279 = vsub.s32 0, %v278
    %v280 = vrot.slane %v275, %v279
    %282 = vmatprep.subr.mxu0 0.0
    %283 = vmatpush1.msra.mxu0 %v274
    %284 = vmatprep.subr.mxu0 0.0
    %285 = vmatpush1.msra.mxu0 %v273
    %286 = vmatprep.subr.mxu0 0.0
    %287 = vmatpush1.msra.mxu0 %v272
    %288 = vmatprep.subr.mxu0 0.0
    %289 = vmatpush1.msra.mxu0 %v271
    %290 = vmatprep.subr.mxu0 0.0
    %291 = vmatpush1.msra.mxu0 %v270
    %292 = vmatprep.subr.mxu0 0.0
    %293 = vmatpush1.msra.mxu0 %v269
    %294 = vmatprep.subr.mxu0 0.0
    %295 = vmatpush1.msra.mxu0 %v268
    %296 = vmatprep.subr.mxu0 0.0
    %297 = vmatpush1.msra.mxu0 %v267
    %298 = vmatprep.subr.mxu0 0.0
    %299 = vmatpush1.msra.mxu0 %v266
    %300 = vmatprep.subr.mxu0 0.0
    %301 = vmatpush1.msra.mxu0 %v265
    %302 = vmatprep.subr.mxu0 0.0
    %303 = vmatpush1.msra.mxu0 %v264
    %304 = vmatprep.subr.mxu0 0.0
    %305 = vmatpush1.msra.mxu0 %v263
    %306 = vmatprep.subr.mxu0 0.0
    %307 = vmatpush1.msra.mxu0 %v262
    %308 = vmatprep.subr.mxu0 0.0
    %309 = vmatpush1.msra.mxu0 %v261
    %310 = vmatprep.subr.mxu0 0.0
    %311 = vmatpush1.msra.mxu0 %v260
    %312 = vmatprep.subr.mxu0 0.0
    %313 = vmatpush1.msra.mxu0 %v259
    %314 = vmatprep.subr.mxu0 0.0
    %315 = vmatpush2.msra.mxu0 0.0
    %316 = vmatprep.subr.mxu0 0.0
    %317 = vmatpush2.msra.mxu0 0.0
    %318 = vmatprep.subr.mxu0 0.0
    %319 = vmatpush2.msra.mxu0 0.0
    %320 = vmatprep.subr.mxu0 0.0
    %321 = vmatpush2.msra.mxu0 0.0
    %322 = vmatprep.subr.mxu0 0.0
    %323 = vmatpush2.msra.mxu0 0.0
    %324 = vmatprep.subr.mxu0 0.0
    %325 = vmatpush2.msra.mxu0 0.0
    %326 = vmatprep.subr.mxu0 0.0
    %327 = vmatpush2.msra.mxu0 0.0
    %328 = vmatprep.subr.mxu0 0.0
    %329 = vmatpush2.msra.mxu0 0.0
    %330 = vmatprep.subr.mxu0 0.0
    %331 = vmatpush2.msra.mxu0 0.0
    %332 = vmatprep.subr.mxu0 0.0
    %333 = vmatpush2.msra.mxu0 0.0
    %334 = vmatprep.subr.mxu0 0.0
    %335 = vmatpush2.msra.mxu0 0.0
    %336 = vmatprep.subr.mxu0 0.0
    %337 = vmatpush2.msra.mxu0 0.0
    %338 = vmatprep.subr.mxu0 0.0
    %339 = vmatpush2.msra.mxu0 0.0
    %340 = vmatprep.subr.mxu0 0.0
    %341 = vmatpush2.msra.mxu0 0.0
    %342 = vmatprep.subr.mxu0 0.0
    %343 = vmatpush2.msra.mxu0 0.0
    %344 = vmatprep.subr.mxu0 0.0
    %345 = vmatpush2.msra.mxu0 0.0
    %346 = vmatprep.mubr.f32.mxu0 0.0
    %347 = vmatmul.mubr.f32.gmra.mxu0 %v256
    %v348 = vpop.f32.mrf.mxu0
    %v349 = vadd.f32 %v280, %v348
    %v350 = vpop.f32.mrf.mxu0
    %351 = vdwg.mxu0
    %352 = vst [vmem:[#allocation8] sm:$0xff] %v349
    // Predicated region
    $region30: #{tpu_custom_call.1} parent=1 // pred_check
      _
    $region31: #{tpu_custom_call.1} parent=1 // pred_check_branch
      %354 = sbr.rel (0) target = $region33
    $region32: #{tpu_custom_call.1} parent=1 // pred_region
      %s356 = ssub.s32 128, 128
      %357 = vsyncadd [#allocation4], %s356
      %s359 = sshll.u32 [#allocation8], 4
      %s360 = int_to_ptr.vmem [resolvable:$true] %s359
      %362 = dma.vmem_to_hbm [thread:$0]  %s360, 128, %s4, [#allocation4]
    $region33: #{tpu_custom_call.1} parent=1 // pred_fallthru
      _
    // Predicated region
    $region34: #{tpu_custom_call.1} parent=1 // pred_check
      _
    $region35: #{tpu_custom_call.1} parent=1 // pred_check_branch
      %364 = sbr.rel (0) target = $region37
    $region36: #{tpu_custom_call.1} parent=1 // pred_region
      %365 = dma.done [#allocation4], 128
    $region37: #{tpu_custom_call.1} parent=1 // pred_fallthru
      _
    %366 = vsyncpa [#allocation3], 1
    %367 = vsyncpa [#allocation6], 1
    %368 = vsyncpa [#allocation4], 1

</llo_original>
